<compile_context>
chip_gen: v7x
topology: tpu7x:2x2x1
jax: 0.10.0
libtpu: 0.0.40
codegen_flags: <defaults>
</compile_context>

<pallas_src>
import jax
import jax.numpy as jnp
from jax.experimental import pallas as pl
from jax.experimental.pallas import tpu as pltpu


def _round_up(x, m):
    return ((x + m - 1) // m) * m


def transition_kernel(x_ref, scale_ref, bias_ref, w_ref, o_ref):
    # x_ref:     (1, 4, TS, Cin_p) bf16  -- 4 = 2x2 pool window, TS pooled pixels
    # scale_ref: (1, 1, 1, Cin_p) f32    -- folded BN scale
    # bias_ref:  (1, 1, 1, Cin_p) f32    -- folded BN bias
    # w_ref:     (Cin_p, Cout_p) bf16    -- 1x1 conv weight with 0.25 pool factor folded in
    # o_ref:     (1, TS, Cout_p) f32
    x = x_ref[...].astype(jnp.float32)                       # upcast: v5e VPU has no bf16
    h = jnp.maximum(x * scale_ref[...] + bias_ref[...], 0.0)  # BN affine + ReLU (VPU)
    p = jnp.sum(h, axis=1)                                    # (1, TS, Cin_p): window sum
    p2 = p.reshape(p.shape[1], p.shape[2]).astype(jnp.bfloat16)
    y = jnp.dot(p2, w_ref[...], preferred_element_type=jnp.float32)   # MXU
    o_ref[...] = y[None].astype(o_ref.dtype)


def transition_forward(x_nchw, gamma, beta, conv_w, eps=1e-5):
    """x_nchw: (N, Cin, H, W); conv_w: (Cout, Cin) (1x1 kernel squeezed)."""
    N, Cin, H, W = x_nchw.shape
    Cout = conv_w.shape[0]
    assert H % 2 == 0 and W % 2 == 0, "AvgPool2d(2,2) expects even H, W"
    Hp, Wp = H // 2, W // 2
    S = Hp * Wp

    # Channel padding policy (lane width = 128).
    Cin_p = _round_up(Cin, 128) if Cin >= 128 else Cin
    Cout_p = max(128, _round_up(Cout, 128))

    # ---- fold training-mode BatchNorm into per-channel scale / bias ----
    xf = x_nchw.astype(jnp.float32)
    mean = jnp.mean(xf, axis=(0, 2, 3))
    var = jnp.var(xf, axis=(0, 2, 3))        # biased variance, as PyTorch normalizes with
    scale = gamma.astype(jnp.float32) / jnp.sqrt(var + eps)
    bias = beta.astype(jnp.float32) - mean * scale
    # TODO(synk): fold the BN mean/var reduction into a Pallas pre-pass to save one
    # full HBM read of x (optional restructure flagged in the perf review).

    scale_p = jnp.pad(scale, (0, Cin_p - Cin)).reshape(1, 1, 1, Cin_p)
    bias_p = jnp.pad(bias, (0, Cin_p - Cin)).reshape(1, 1, 1, Cin_p)

    # ---- 1x1 conv weight: transpose, fold 0.25 pool factor, pad, cast bf16 ----
    w = jnp.transpose(conv_w.astype(jnp.float32)) * 0.25          # (Cin, Cout)
    w = jnp.pad(w, ((0, Cin_p - Cin), (0, Cout_p - Cout))).astype(jnp.bfloat16)

    # ---- single fused re-layout: NCHW -> (N, 4, S, Cin_p) bf16 (one copy) ----
    xg = xf.reshape(N, Cin, Hp, 2, Wp, 2)
    xg = jnp.transpose(xg, (0, 3, 5, 2, 4, 1))                     # (N, 2, 2, Hp, Wp, Cin)
    xg = xg.reshape(N, 4, S, Cin)
    if Cin_p != Cin:
        xg = jnp.pad(xg, ((0, 0), (0, 0), (0, 0), (0, Cin_p - Cin)))
    xg = xg.astype(jnp.bfloat16)

    # ---- spatial tile sized for v7x's 32 MiB scoped VMEM (double-buffered) ----
    per_row = 2 * (4 * Cin_p * 2) + 2 * (Cout_p * 4)   # bf16 in x2 bufs + f32 out x2 bufs
    ts = (12 * 1024 * 1024) // per_row
    ts = min(max(ts, 512), 4096)                        # v5e: keep matmul M-tile tall
    ts = (ts // 8) * 8                                  # sublane-aligned tile
    ts = min(ts, S)                                     # small images: one block covers S
    grid = (N, pl.cdiv(S, ts))

    cost = pl.CostEstimate(
        flops=int(2 * N * S * Cin_p * Cout_p + 3 * 4 * N * S * Cin_p),
        transcendentals=0,
        bytes_accessed=int(xg.size * 2 + N * S * Cout_p * 4
                           + Cin_p * Cout_p * 2 + 2 * Cin_p * 4),
    )

    out = pl.pallas_call(
        transition_kernel,
        out_shape=jax.ShapeDtypeStruct((N, S, Cout_p), jnp.float32),
        grid_spec=pltpu.PrefetchScalarGridSpec(
            num_scalar_prefetch=0,
            grid=grid,
            in_specs=[
                pl.BlockSpec((1, 4, ts, Cin_p), lambda n, s: (n, 0, s, 0)),
                pl.BlockSpec((1, 1, 1, Cin_p), lambda n, s: (0, 0, 0, 0)),
                pl.BlockSpec((1, 1, 1, Cin_p), lambda n, s: (0, 0, 0, 0)),
                pl.BlockSpec((Cin_p, Cout_p), lambda n, s: (0, 0)),
            ],
            out_specs=pl.BlockSpec((1, ts, Cout_p), lambda n, s: (n, s, 0)),
        ),
        compiler_params=pltpu.CompilerParams(
            dimension_semantics=("parallel", "parallel"),
            vmem_limit_bytes=32 * 1024 * 1024,
        ),
        cost_estimate=cost,
    )(xg, scale_p, bias_p, w)

    # ---- un-pad channels, back to NCHW ----
    out = out[:, :, :Cout].reshape(N, Hp, Wp, Cout)
    return jnp.transpose(out, (0, 3, 1, 2))


def transition_reference(x_nchw, gamma, beta, conv_w, eps=1e-5):
    """Pure-JAX f32 reference matching the PyTorch forward (training-mode BN)."""
    x = x_nchw.astype(jnp.float32)
    mean = jnp.mean(x, axis=(0, 2, 3), keepdims=True)
    var = jnp.var(x, axis=(0, 2, 3), keepdims=True)
    xn = gamma[None, :, None, None] * (x - mean) / jnp.sqrt(var + eps) \
        + beta[None, :, None, None]
    h = jnp.maximum(xn, 0.0)
    y = jnp.einsum('nchw,oc->nohw', h, conv_w)       # 1x1 conv, bias=False
    N, Co, H, W = y.shape
    y = y.reshape(N, Co, H // 2, 2, W // 2, 2)
    return jnp.mean(y, axis=(3, 5))                  # 2x2 avg pool, stride 2


if __name__ == "__main__":
    key = jax.random.PRNGKey(0)
    k_x, k_g, k_b, k_w = jax.random.split(key, 4)

    N, Cin, H, W = 2, 4, 16, 16
    Cout = 2

    x = jax.random.normal(k_x, (N, Cin, H, W), dtype=jnp.float32)
    gamma = 1.0 + 0.1 * jax.random.normal(k_g, (Cin,), dtype=jnp.float32)
    beta = 0.1 * jax.random.normal(k_b, (Cin,), dtype=jnp.float32)
    conv_w = 0.2 * jax.random.normal(k_w, (Cout, Cin), dtype=jnp.float32)  # 1x1 kernel

    out = transition_forward(x, gamma, beta, conv_w)
    out = jax.block_until_ready(out)

    ref = transition_reference(x, gamma, beta, conv_w)
    assert out.shape == (N, Cout, H // 2, W // 2), out.shape
    # bf16-streamed activations / bf16 matmul: loosened tolerance vs f32 reference.
    assert jnp.allclose(out, ref, rtol=2e-2, atol=2e-2), \
        float(jnp.max(jnp.abs(out - ref)))

    print("KERNEL_OK")
</pallas_src>

<mosaic_0001>
module attributes {stable_mosaic.version = 11 : i64} {
  func.func @transition_kernel(%arg0: i32, %arg1: i32, %arg2: memref<1x4x64x4xbf16, #tpu.memory_space<vmem>>, %arg3: memref<1x1x1x4xf32, #tpu.memory_space<vmem>>, %arg4: memref<1x1x1x4xf32, #tpu.memory_space<vmem>>, %arg5: memref<4x128xbf16, #tpu.memory_space<vmem>>, %arg6: memref<1x64x128xf32, #tpu.memory_space<vmem>>) attributes {dimension_semantics = [#tpu.dimension_semantics<parallel>, #tpu.dimension_semantics<parallel>], iteration_bounds = array<i64: 2, 1>, scalar_prefetch = 0 : i64, scratch_operands = 0 : i64, tpu.core_type = #tpu.core_type<tc>, window_params = [{transform_indices = @transform_0, window_bounds = array<i64: 1, 4, 64, 4>}, {pipeline_mode = #tpu.pipeline_mode<synchronous>, transform_indices = @transform_1, window_bounds = array<i64: 1, 1, 1, 4>}, {pipeline_mode = #tpu.pipeline_mode<synchronous>, transform_indices = @transform_2, window_bounds = array<i64: 1, 1, 1, 4>}, {pipeline_mode = #tpu.pipeline_mode<synchronous>, transform_indices = @transform_3, window_bounds = array<i64: 4, 128>}, {transform_indices = @transform_4, window_bounds = array<i64: 1, 64, 128>}]} {
    %c0 = arith.constant 0 : index
    %c0_0 = arith.constant 0 : index
    %c0_1 = arith.constant 0 : index
    %c0_2 = arith.constant 0 : index
    %0 = vector.load %arg2[%c0, %c0_0, %c0_1, %c0_2] : memref<1x4x64x4xbf16, #tpu.memory_space<vmem>>, vector<1x4x64x4xbf16>
    %1 = arith.extf %0 : vector<1x4x64x4xbf16> to vector<1x4x64x4xf32>
    %c0_3 = arith.constant 0 : index
    %c0_4 = arith.constant 0 : index
    %c0_5 = arith.constant 0 : index
    %c0_6 = arith.constant 0 : index
    %2 = vector.load %arg3[%c0_3, %c0_4, %c0_5, %c0_6] : memref<1x1x1x4xf32, #tpu.memory_space<vmem>>, vector<1x1x1x4xf32>
    %3 = vector.broadcast %2 : vector<1x1x1x4xf32> to vector<1x4x64x4xf32>
    %4 = arith.mulf %1, %3 : vector<1x4x64x4xf32>
    %c0_7 = arith.constant 0 : index
    %c0_8 = arith.constant 0 : index
    %c0_9 = arith.constant 0 : index
    %c0_10 = arith.constant 0 : index
    %5 = vector.load %arg4[%c0_7, %c0_8, %c0_9, %c0_10] : memref<1x1x1x4xf32, #tpu.memory_space<vmem>>, vector<1x1x1x4xf32>
    %6 = vector.broadcast %5 : vector<1x1x1x4xf32> to vector<1x4x64x4xf32>
    %7 = arith.addf %4, %6 : vector<1x4x64x4xf32>
    %cst = arith.constant 0.000000e+00 : f32
    %8 = vector.broadcast %cst : f32 to vector<1x4x64x4xf32>
    %9 = arith.maximumf %7, %8 : vector<1x4x64x4xf32>
    %cst_11 = arith.constant dense<0.000000e+00> : vector<1x64x4xf32>
    %10 = vector.multi_reduction <add>, %9, %cst_11 [1] : vector<1x4x64x4xf32> to vector<1x64x4xf32>
    %11 = vector.shape_cast %10 : vector<1x64x4xf32> to vector<64x4xf32>
    %12 = arith.truncf %11 : vector<64x4xf32> to vector<64x4xbf16>
    %c0_12 = arith.constant 0 : index
    %c0_13 = arith.constant 0 : index
    %13 = vector.load %arg5[%c0_12, %c0_13] : memref<4x128xbf16, #tpu.memory_space<vmem>>, vector<4x128xbf16>
    %cst_14 = arith.constant dense<0.000000e+00> : vector<64x128xf32>
    %14 = tpu.matmul %12, %13, %cst_14 {dimension_numbers = #tpu.dot_dimension_numbers<[1], [0], [0], [1], [0, 0, 1, 1], [], []>} : vector<64x4xbf16>, vector<4x128xbf16>, vector<64x128xf32> -> vector<64x128xf32>
    %15 = vector.shape_cast %14 : vector<64x128xf32> to vector<1x64x128xf32>
    %c0_15 = arith.constant 0 : index
    %c0_16 = arith.constant 0 : index
    %c0_17 = arith.constant 0 : index
    %16 = vector.load %arg6[%c0_15, %c0_16, %c0_17] : memref<1x64x128xf32, #tpu.memory_space<vmem>>, vector<1x64x128xf32>
    tpu.vector_store %arg6[%c0_15, %c0_16, %c0_17], %15 {strides = array<i32>} : memref<1x64x128xf32, #tpu.memory_space<vmem>>, vector<1x64x128xf32>,
    return
  }
  func.func @transform_0(%arg0: i32, %arg1: i32) -> (i32, i32, i32, i32) {
    %c0_i32 = arith.constant 0 : i32
    %c0_i32_0 = arith.constant 0 : i32
    %c0_i32_1 = arith.constant 0 : i32
    return %arg0, %c0_i32, %arg1, %c0_i32_0 : i32, i32, i32, i32
  }
  func.func @transform_1(%arg0: i32, %arg1: i32) -> (i32, i32, i32, i32) {
    %c0_i32 = arith.constant 0 : i32
    %c0_i32_0 = arith.constant 0 : i32
    %c0_i32_1 = arith.constant 0 : i32
    %c0_i32_2 = arith.constant 0 : i32
    %c0_i32_3 = arith.constant 0 : i32
    return %c0_i32, %c0_i32_0, %c0_i32_1, %c0_i32_2 : i32, i32, i32, i32
  }
  func.func @transform_2(%arg0: i32, %arg1: i32) -> (i32, i32, i32, i32) {
    %c0_i32 = arith.constant 0 : i32
    %c0_i32_0 = arith.constant 0 : i32
    %c0_i32_1 = arith.constant 0 : i32
    %c0_i32_2 = arith.constant 0 : i32
    %c0_i32_3 = arith.constant 0 : i32
    return %c0_i32, %c0_i32_0, %c0_i32_1, %c0_i32_2 : i32, i32, i32, i32
  }
  func.func @transform_3(%arg0: i32, %arg1: i32) -> (i32, i32) {
    %c0_i32 = arith.constant 0 : i32
    %c0_i32_0 = arith.constant 0 : i32
    %c0_i32_1 = arith.constant 0 : i32
    return %c0_i32, %c0_i32_0 : i32, i32
  }
  func.func @transform_4(%arg0: i32, %arg1: i32) -> (i32, i32, i32) {
    %c0_i32 = arith.constant 0 : i32
    %c0_i32_0 = arith.constant 0 : i32
    return %arg0, %arg1, %c0_i32 : i32, i32, i32
  }
}

</mosaic_0001>

<llo_original>
// kernel: tpu_custom_call.1
$region0: #{tpu_custom_call.1}
  #allocation0 [shape = 'u32[]', space=smem, size = 0x4, offset = 0x4, fixed_abs, tag = 'smem constant byte address 0x4 - core index']
  #allocation1 [shape = 'u32[144,128]{1,0:T(1,128)}', space=vmem, size = 0x12000, scoped, tag = 'internal scratch']
  %s0 = inlined_call_operand.vmem [shape: bf16[2,4,64,4], index: 0, kind: input, shape index: {}]
  %s1 = inlined_call_operand.vmem [shape: f32[1,1,1,4], index: 1, kind: input, shape index: {}]
  %s2 = inlined_call_operand.vmem [shape: f32[1,1,1,4], index: 2, kind: input, shape index: {}]
  %s3 = inlined_call_operand.vmem [shape: bf16[4,128], index: 3, kind: input, shape index: {}]
  %s4 = inlined_call_operand.hbm [shape: f32[2,64,128], index: 4, kind: output, shape index: {}]
  %s5 = sld [smem:[#allocation0]]
  $region49: #{tpu_custom_call.1} parent=0
    _
  %s7 = ssub.s32 1, %s5
  %s8 = scalar_select 0, %s7, %s5
  $region1: #{tpu_custom_call.1} parent=0
    #allocation2 [shape = 'u8[65536]{0}', space=vmem, size = 0x10000, scoped, tag = 'output window, operand 0']
    #allocation3 [shape = 's32[2]{0}', space=sflag, size = 0x8, scoped, tag = 'scoped memory for tpu_custom_call.1']
    %9 = vsyncpa [#allocation3], 0
    %s10 = scalar_lea.sflag [#allocation3], 1
    %11 = vsyncpa %s10, 0
    loop: start=0, step=1, limit=4
    $region2: #{tpu_custom_call.1} parent=1 // loop_pre_header
      _
    $region3: #{tpu_custom_call.1} parent=1 // loop_header
      %s13 = sphi 0, %s17
      %p14 = scmp.ge.s32.totalorder %s13, 4
      %s20 = sphi 0, %s32
      %s21 = sphi 0, %s28
      %s22 = sphi 0, %s20
      %s23 = sphi 0, %s21
      %s24 = sphi 0, %s22
      %s25 = sphi 0, %s23
      %s37 = sphi 0, %s39
      %s40 = sphi 0, %s37
      %s41 = sphi 0, %s40
      %s57 = sphi 0, %s41
      %s61 = sphi 0, %s61
      %s63 = sphi 0, %s61
      %s64 = sphi 0, %s63
      %s78 = sphi 0, %s64
      %s82 = sphi 0, %s82
      %s84 = sphi 0, %s82
      %s85 = sphi 0, %s84
      %s99 = sphi 0, %s85
      %s103 = sphi 0, %s103
      %s105 = sphi 0, %s103
      %s106 = sphi 0, %s105
      %s120 = sphi 0, %s106
      %s128 = sphi 0, %s130
      %s131 = sphi 0, %s128
      %s132 = sphi 0, %s131
      %s148 = sphi 0, %s132
    $region4: #{tpu_custom_call.1} parent=1 // loop_header_branch
      %16 = sbr.rel (%p14) target = $region8
    $region5: #{tpu_custom_call.1} parent=1 // loop_body
      %s18 = ssub.s32 %s13, 1
      %s19 = ssub.s32 %s13, 2
      %s26 = sadd.s32 1, %s21
      %p27 = scmp.ge.s32.totalorder %s26, 1
      %s28 = scalar_select %p27, 0, %s26
      %s29 = sadd.s32 1, %s20
      %s30 = scalar_select %p27, %s29, %s20
      %p31 = scmp.ge.s32.totalorder %s30, 2
      %s32 = scalar_select %p31, 0, %s30
      %s33 = ssub.s32 %s20, %s32
      %s34 = ssub.s32 %s21, %s28
      %s35 = sor.u32 %s33, %s34
      %p36 = scmp.eq.s32.totalorder %s35, 0
      %s38 = sadd.s32 %s37, 1
      %s39 = scalar_select %p36, %s37, %s38
      %p42 = pneg %p36
      %p43 = scmp.eq.s32.totalorder %s13, 1
      %p44 = por %p42, %p43
      %p45 = scmp.ne.s32.totalorder %s37, %s40
      %p46 = scmp.eq.s32.totalorder %s13, 0
      %p47 = por %p45, %p46
      %p48 = scmp.ne.s32.totalorder %s37, %s40
      %p49 = scmp.eq.s32.totalorder %s18, 1
      %p50 = por %p48, %p49
      %p51 = scmp.ne.s32.totalorder %s40, %s41
      %p52 = scmp.eq.s32.totalorder %s18, 0
      %p53 = por %p51, %p52
      %p54 = scmp.ne.s32.totalorder %s40, %s41
      %p55 = scmp.eq.s32.totalorder %s19, 1
      %p56 = por %p54, %p55
      %p58 = scmp.ne.s32.totalorder %s41, %s57
      %p59 = scmp.eq.s32.totalorder %s19, 0
      %p60 = por %p58, %p59
      %s62 = sadd.s32 %s61, 1
      %p65 = scmp.eq.s32.totalorder %s13, 1
      %p66 = scmp.ne.s32.totalorder %s61, %s63
      %p67 = scmp.eq.s32.totalorder %s13, 0
      %p68 = por %p66, %p67
      %p69 = scmp.ne.s32.totalorder %s61, %s63
      %p70 = scmp.eq.s32.totalorder %s18, 1
      %p71 = por %p69, %p70
      %p72 = scmp.ne.s32.totalorder %s63, %s64
      %p73 = scmp.eq.s32.totalorder %s18, 0
      %p74 = por %p72, %p73
      %p75 = scmp.ne.s32.totalorder %s63, %s64
      %p76 = scmp.eq.s32.totalorder %s19, 1
      %p77 = por %p75, %p76
      %p79 = scmp.ne.s32.totalorder %s64, %s78
      %p80 = scmp.eq.s32.totalorder %s19, 0
      %p81 = por %p79, %p80
      %s83 = sadd.s32 %s82, 1
      %p86 = scmp.eq.s32.totalorder %s13, 1
      %p87 = scmp.ne.s32.totalorder %s82, %s84
      %p88 = scmp.eq.s32.totalorder %s13, 0
      %p89 = por %p87, %p88
      %p90 = scmp.ne.s32.totalorder %s82, %s84
      %p91 = scmp.eq.s32.totalorder %s18, 1
      %p92 = por %p90, %p91
      %p93 = scmp.ne.s32.totalorder %s84, %s85
      %p94 = scmp.eq.s32.totalorder %s18, 0
      %p95 = por %p93, %p94
      %p96 = scmp.ne.s32.totalorder %s84, %s85
      %p97 = scmp.eq.s32.totalorder %s19, 1
      %p98 = por %p96, %p97
      %p100 = scmp.ne.s32.totalorder %s85, %s99
      %p101 = scmp.eq.s32.totalorder %s19, 0
      %p102 = por %p100, %p101
      %s104 = sadd.s32 %s103, 1
      %p107 = scmp.eq.s32.totalorder %s13, 1
      %p108 = scmp.ne.s32.totalorder %s103, %s105
      %p109 = scmp.eq.s32.totalorder %s13, 0
      %p110 = por %p108, %p109
      %p111 = scmp.ne.s32.totalorder %s103, %s105
      %p112 = scmp.eq.s32.totalorder %s18, 1
      %p113 = por %p111, %p112
      %p114 = scmp.ne.s32.totalorder %s105, %s106
      %p115 = scmp.eq.s32.totalorder %s18, 0
      %p116 = por %p114, %p115
      %p117 = scmp.ne.s32.totalorder %s105, %s106
      %p118 = scmp.eq.s32.totalorder %s19, 1
      %p119 = por %p117, %p118
      %p121 = scmp.ne.s32.totalorder %s106, %s120
      %p122 = scmp.eq.s32.totalorder %s19, 0
      %p123 = por %p121, %p122
      %s124 = ssub.s32 %s20, %s32
      %s125 = ssub.s32 %s21, %s28
      %s126 = sor.u32 %s124, %s125
      %p127 = scmp.eq.s32.totalorder %s126, 0
      %s129 = sadd.s32 %s128, 1
      %s130 = scalar_select %p127, %s128, %s129
      %p133 = pneg %p127
      %p134 = scmp.eq.s32.totalorder %s13, 1
      %p135 = por %p133, %p134
      %p136 = scmp.ne.s32.totalorder %s128, %s131
      %p137 = scmp.eq.s32.totalorder %s13, 0
      %p138 = por %p136, %p137
      %p139 = scmp.ne.s32.totalorder %s128, %s131
      %p140 = scmp.eq.s32.totalorder %s18, 1
      %p141 = por %p139, %p140
      %p142 = scmp.ne.s32.totalorder %s131, %s132
      %p143 = scmp.eq.s32.totalorder %s18, 0
      %p144 = por %p142, %p143
      %p145 = scmp.ne.s32.totalorder %s131, %s132
      %p146 = scmp.eq.s32.totalorder %s19, 1
      %p147 = por %p145, %p146
      %p149 = scmp.ne.s32.totalorder %s132, %s148
      %p150 = scmp.eq.s32.totalorder %s19, 0
      %p151 = por %p149, %p150
      %p152 = scmp.le.s32.totalorder 1, %s13
      %p153 = scmp.lt.s32.totalorder %s13, 3
      %p154 = pnand %p152, %p153
      %p155 = pneg %p154
      // Predicated region
      $region9: #{tpu_custom_call.1} parent=5 // pred_check
        _
      $region10: #{tpu_custom_call.1} parent=5 // pred_check_branch
        %157 = sbr.rel (%p154) target = $region12
      $region11: #{tpu_custom_call.1} parent=5 // pred_region
        %s158 = ssub.s32 %s13, 1
        // Predicated region
        $region13: #{tpu_custom_call.1} parent=11 // pred_check
          %p159 = pneg %p74
        $region14: #{tpu_custom_call.1} parent=11 // pred_check_branch
          %161 = sbr.rel (%p159) target = $region16
        $region15: #{tpu_custom_call.1} parent=11 // pred_region
          _
        $region16: #{tpu_custom_call.1} parent=11 // pred_fallthru
          _
        // Predicated region
        $region17: #{tpu_custom_call.1} parent=11 // pred_check
          %p162 = pneg %p95
        $region18: #{tpu_custom_call.1} parent=11 // pred_check_branch
          %164 = sbr.rel (%p162) target = $region20
        $region19: #{tpu_custom_call.1} parent=11 // pred_region
          _
        $region20: #{tpu_custom_call.1} parent=11 // pred_fallthru
          _
        // Predicated region
        $region21: #{tpu_custom_call.1} parent=11 // pred_check
          %p165 = pneg %p116
        $region22: #{tpu_custom_call.1} parent=11 // pred_check_branch
          %167 = sbr.rel (%p165) target = $region24
        $region23: #{tpu_custom_call.1} parent=11 // pred_region
          _
        $region24: #{tpu_custom_call.1} parent=11 // pred_fallthru
          _
      $region12: #{tpu_custom_call.1} parent=5 // pred_fallthru
        _
      %p168 = scmp.lt.s32.totalorder %s13, 2
      // Predicated region
      $region25: #{tpu_custom_call.1} parent=5 // pred_check
        %p169 = pneg %p168
      $region26: #{tpu_custom_call.1} parent=5 // pred_check_branch
        %171 = sbr.rel (%p169) target = $region28
      $region27: #{tpu_custom_call.1} parent=5 // pred_region
        // Predicated region
        $region29: #{tpu_custom_call.1} parent=27 // pred_check
          %p172 = pneg %p47
        $region30: #{tpu_custom_call.1} parent=27 // pred_check_branch
          %174 = sbr.rel (%p172) target = $region32
        $region31: #{tpu_custom_call.1} parent=27 // pred_region
          %s175 = smul.u32 8, %s21
          %p176 = scmp.lt.s32.totalorder %s20, 1
          %s177 = scalar_select %p176, %s20, 1
          %p178 = scmp.lt.s32.totalorder %s175, 7
          %s179 = scalar_select %p178, %s175, 7
          %s180 = smul.addr %s177, 32
          %s181 = sadd.s32 %s179, %s180
          %s182 = smul.addr %s181, 4
          %s183 = scalar_lea.vmem %s0, %s182
          %s184 = smul.u32 8, %s21
        $region32: #{tpu_custom_call.1} parent=27 // pred_fallthru
          _
      $region28: #{tpu_custom_call.1} parent=5 // pred_fallthru
        _
      %p185 = scmp.le.s32.totalorder 1, %s13
      %p186 = scmp.lt.s32.totalorder %s13, 3
      %p187 = pnand %p185, %p186
      %p188 = pneg %p187
      // Predicated region
      $region33: #{tpu_custom_call.1} parent=5 // pred_check
        _
      $region34: #{tpu_custom_call.1} parent=5 // pred_check_branch
        %190 = sbr.rel (%p187) target = $region36
      $region35: #{tpu_custom_call.1} parent=5 // pred_region
        %s191 = ssub.s32 %s13, 1
        %s192 = smul.u32 8, %s23
        %p193 = scmp.lt.s32.totalorder %s22, 1
        %s194 = scalar_select %p193, %s22, 1
        %p195 = scmp.lt.s32.totalorder %s192, 7
        %s196 = scalar_select %p195, %s192, 7
        %s197 = smul.addr %s194, 32
        %s198 = sadd.s32 %s196, %s197
        %s199 = smul.addr %s198, 4
        %s200 = scalar_lea.vmem %s0, %s199
        %p201 = pneg %p53
        %p202 = pneg %p50
        %p203 = pneg %p74
        %p204 = pneg %p71
        %p205 = pneg %p95
        %p206 = pneg %p92
        %p207 = pneg %p116
        %p208 = pneg %p113
        %p209 = pneg %p144
        %p210 = pneg %p141
        %s211 = sand.u32 %s131, 1
        %s212 = scalar_lea.sflag [#allocation3], %s211
        %s213 = sand.u32 %s131, 1
        %s214 = smul.addr %s213, 64
        %s215 = scalar_lea.vmem [#allocation2], %s214
        %s216 = smul.u32 8, %s23
        %p217 = scmp.lt.s32.totalorder %s22, 1
        %s218 = scalar_select %p217, %s22, 1
        %p219 = scmp.lt.s32.totalorder %s216, 7
        %s220 = scalar_select %p219, %s216, 7
        %s221 = smul.addr %s218, 32
        %s222 = sadd.s32 %s220, %s221
        %s223 = smul.addr %s222, 4
        %s224 = scalar_lea.vmem %s0, %s223
        %s225 = smul.u32 8, %s23
        %s226 = smul.u32 8, %s23
        %v228 = vld [vmem:[%s224] sm:$0xf]
        %v229 = vld [vmem:[%s224 + $0x4] sm:$0xf]
        %v230 = vld [vmem:[%s224 + $0x8] sm:$0xf]
        %v231 = vld [vmem:[%s224 + $0xc] sm:$0xf]
        %v232 = vld [vmem:[%s224 + $0x10] sm:$0xf]
        %v233 = vld [vmem:[%s224 + $0x14] sm:$0xf]
        %v234 = vld [vmem:[%s224 + $0x18] sm:$0xf]
        %v235 = vld [vmem:[%s224 + $0x1c] sm:$0xf]
        %v236 = vld [vmem:[%s224 + $0x20] sm:$0xf]
        %v237 = vld [vmem:[%s224 + $0x24] sm:$0xf]
        %v238 = vld [vmem:[%s224 + $0x28] sm:$0xf]
        %v239 = vld [vmem:[%s224 + $0x2c] sm:$0xf]
        %v240 = vld [vmem:[%s224 + $0x30] sm:$0xf]
        %v241 = vld [vmem:[%s224 + $0x34] sm:$0xf]
        %v242 = vld [vmem:[%s224 + $0x38] sm:$0xf]
        %v243 = vld [vmem:[%s224 + $0x3c] sm:$0xf]
        %v244 = vld [vmem:[%s224 + $0x40] sm:$0xf]
        %v245 = vld [vmem:[%s224 + $0x44] sm:$0xf]
        %v246 = vld [vmem:[%s224 + $0x48] sm:$0xf]
        %v247 = vld [vmem:[%s224 + $0x4c] sm:$0xf]
        %v248 = vld [vmem:[%s224 + $0x50] sm:$0xf]
        %v249 = vld [vmem:[%s224 + $0x54] sm:$0xf]
        %v250 = vld [vmem:[%s224 + $0x58] sm:$0xf]
        %v251 = vld [vmem:[%s224 + $0x5c] sm:$0xf]
        %v252 = vld [vmem:[%s224 + $0x60] sm:$0xf]
        %v253 = vld [vmem:[%s224 + $0x64] sm:$0xf]
        %v254 = vld [vmem:[%s224 + $0x68] sm:$0xf]
        %v255 = vld [vmem:[%s224 + $0x6c] sm:$0xf]
        %v256 = vld [vmem:[%s224 + $0x70] sm:$0xf]
        %v257 = vld [vmem:[%s224 + $0x74] sm:$0xf]
        %v258 = vld [vmem:[%s224 + $0x78] sm:$0xf]
        %v259 = vld [vmem:[%s224 + $0x7c] sm:$0xf]
        %v260 = vunpack.c.l.bf16 %v228
        %v261 = vunpack.c.l.bf16 %v229
        %v262 = vunpack.c.l.bf16 %v230
        %v263 = vunpack.c.l.bf16 %v231
        %v264 = vunpack.c.l.bf16 %v232
        %v265 = vunpack.c.l.bf16 %v233
        %v266 = vunpack.c.l.bf16 %v234
        %v267 = vunpack.c.l.bf16 %v235
        %v268 = vunpack.c.l.bf16 %v236
        %v269 = vunpack.c.l.bf16 %v237
        %v270 = vunpack.c.l.bf16 %v238
        %v271 = vunpack.c.l.bf16 %v239
        %v272 = vunpack.c.l.bf16 %v240
        %v273 = vunpack.c.l.bf16 %v241
        %v274 = vunpack.c.l.bf16 %v242
        %v275 = vunpack.c.l.bf16 %v243
        %v276 = vunpack.c.l.bf16 %v244
        %v277 = vunpack.c.l.bf16 %v245
        %v278 = vunpack.c.l.bf16 %v246
        %v279 = vunpack.c.l.bf16 %v247
        %v280 = vunpack.c.l.bf16 %v248
        %v281 = vunpack.c.l.bf16 %v249
        %v282 = vunpack.c.l.bf16 %v250
        %v283 = vunpack.c.l.bf16 %v251
        %v284 = vunpack.c.l.bf16 %v252
        %v285 = vunpack.c.l.bf16 %v253
        %v286 = vunpack.c.l.bf16 %v254
        %v287 = vunpack.c.l.bf16 %v255
        %v288 = vunpack.c.l.bf16 %v256
        %v289 = vunpack.c.l.bf16 %v257
        %v290 = vunpack.c.l.bf16 %v258
        %v291 = vunpack.c.l.bf16 %v259
        %v292 = vld [vmem:[%s1] sm:$0x1]
        %v294 = vlaneseq
        %v295 = vshrl.u32 %v294, 7
        %v296 = vsub.s32 0, %v295
        %v297 = vrot.slane %v292, %v296
        %v299 = vmul.f32 %v260, %v297
        %v300 = vmul.f32 %v261, %v297
        %v301 = vmul.f32 %v262, %v297
        %v302 = vmul.f32 %v263, %v297
        %v303 = vmul.f32 %v264, %v297
        %v304 = vmul.f32 %v265, %v297
        %v305 = vmul.f32 %v266, %v297
        %v306 = vmul.f32 %v267, %v297
        %v307 = vmul.f32 %v268, %v297
        %v308 = vmul.f32 %v269, %v297
        %v309 = vmul.f32 %v270, %v297
        %v310 = vmul.f32 %v271, %v297
        %v311 = vmul.f32 %v272, %v297
        %v312 = vmul.f32 %v273, %v297
        %v313 = vmul.f32 %v274, %v297
        %v314 = vmul.f32 %v275, %v297
        %v315 = vmul.f32 %v276, %v297
        %v316 = vmul.f32 %v277, %v297
        %v317 = vmul.f32 %v278, %v297
        %v318 = vmul.f32 %v279, %v297
        %v319 = vmul.f32 %v280, %v297
        %v320 = vmul.f32 %v281, %v297
        %v321 = vmul.f32 %v282, %v297
        %v322 = vmul.f32 %v283, %v297
        %v323 = vmul.f32 %v284, %v297
        %v324 = vmul.f32 %v285, %v297
        %v325 = vmul.f32 %v286, %v297
        %v326 = vmul.f32 %v287, %v297
        %v327 = vmul.f32 %v288, %v297
        %v328 = vmul.f32 %v289, %v297
        %v329 = vmul.f32 %v290, %v297
        %v330 = vmul.f32 %v291, %v297
        %v331 = vld [vmem:[%s2] sm:$0x1]
        %v333 = vlaneseq
        %v334 = vshrl.u32 %v333, 7
        %v335 = vsub.s32 0, %v334
        %v336 = vrot.slane %v331, %v335
        %v338 = vadd.f32 %v299, %v336
        %v339 = vadd.f32 %v300, %v336
        %v340 = vadd.f32 %v301, %v336
        %v341 = vadd.f32 %v302, %v336
        %v342 = vadd.f32 %v303, %v336
        %v343 = vadd.f32 %v304, %v336
        %v344 = vadd.f32 %v305, %v336
        %v345 = vadd.f32 %v306, %v336
        %v346 = vadd.f32 %v307, %v336
        %v347 = vadd.f32 %v308, %v336
        %v348 = vadd.f32 %v309, %v336
        %v349 = vadd.f32 %v310, %v336
        %v350 = vadd.f32 %v311, %v336
        %v351 = vadd.f32 %v312, %v336
        %v352 = vadd.f32 %v313, %v336
        %v353 = vadd.f32 %v314, %v336
        %v354 = vadd.f32 %v315, %v336
        %v355 = vadd.f32 %v316, %v336
        %v356 = vadd.f32 %v317, %v336
        %v357 = vadd.f32 %v318, %v336
        %v358 = vadd.f32 %v319, %v336
        %v359 = vadd.f32 %v320, %v336
        %v360 = vadd.f32 %v321, %v336
        %v361 = vadd.f32 %v322, %v336
        %v362 = vadd.f32 %v323, %v336
        %v363 = vadd.f32 %v324, %v336
        %v364 = vadd.f32 %v325, %v336
        %v365 = vadd.f32 %v326, %v336
        %v366 = vadd.f32 %v327, %v336
        %v367 = vadd.f32 %v328, %v336
        %v368 = vadd.f32 %v329, %v336
        %v369 = vadd.f32 %v330, %v336
        %v370 = vmax.f32 %v338, 0.0
        %v371 = vmax.f32 %v339, 0.0
        %v372 = vmax.f32 %v340, 0.0
        %v373 = vmax.f32 %v341, 0.0
        %v374 = vmax.f32 %v342, 0.0
        %v375 = vmax.f32 %v343, 0.0
        %v376 = vmax.f32 %v344, 0.0
        %v377 = vmax.f32 %v345, 0.0
        %v378 = vmax.f32 %v346, 0.0
        %v379 = vmax.f32 %v347, 0.0
        %v380 = vmax.f32 %v348, 0.0
        %v381 = vmax.f32 %v349, 0.0
        %v382 = vmax.f32 %v350, 0.0
        %v383 = vmax.f32 %v351, 0.0
        %v384 = vmax.f32 %v352, 0.0
        %v385 = vmax.f32 %v353, 0.0
        %v386 = vmax.f32 %v354, 0.0
        %v387 = vmax.f32 %v355, 0.0
        %v388 = vmax.f32 %v356, 0.0
        %v389 = vmax.f32 %v357, 0.0
        %v390 = vmax.f32 %v358, 0.0
        %v391 = vmax.f32 %v359, 0.0
        %v392 = vmax.f32 %v360, 0.0
        %v393 = vmax.f32 %v361, 0.0
        %v394 = vmax.f32 %v362, 0.0
        %v395 = vmax.f32 %v363, 0.0
        %v396 = vmax.f32 %v364, 0.0
        %v397 = vmax.f32 %v365, 0.0
        %v398 = vmax.f32 %v366, 0.0
        %v399 = vmax.f32 %v367, 0.0
        %v400 = vmax.f32 %v368, 0.0
        %v401 = vmax.f32 %v369, 0.0
        %vm402 = vcmask 31744
        %v403 = vsel %vm402, %v370, 0.0
        %v404 = vsel %vm402, %v378, 0.0
        %v405 = vadd.f32 %v403, %v404
        %v406 = vsel %vm402, %v386, 0.0
        %v407 = vadd.f32 %v405, %v406
        %v408 = vsel %vm402, %v394, 0.0
        %v409 = vadd.f32 %v407, %v408
        %v410 = vsel %vm402, %v371, 0.0
        %v411 = vsel %vm402, %v379, 0.0
        %v412 = vadd.f32 %v410, %v411
        %v413 = vsel %vm402, %v387, 0.0
        %v414 = vadd.f32 %v412, %v413
        %v415 = vsel %vm402, %v395, 0.0
        %v416 = vadd.f32 %v414, %v415
        %v417 = vsel %vm402, %v372, 0.0
        %v418 = vsel %vm402, %v380, 0.0
        %v419 = vadd.f32 %v417, %v418
        %v420 = vsel %vm402, %v388, 0.0
        %v421 = vadd.f32 %v419, %v420
        %v422 = vsel %vm402, %v396, 0.0
        %v423 = vadd.f32 %v421, %v422
        %v424 = vsel %vm402, %v373, 0.0
        %v425 = vsel %vm402, %v381, 0.0
        %v426 = vadd.f32 %v424, %v425
        %v427 = vsel %vm402, %v389, 0.0
        %v428 = vadd.f32 %v426, %v427
        %v429 = vsel %vm402, %v397, 0.0
        %v430 = vadd.f32 %v428, %v429
        %v431 = vsel %vm402, %v374, 0.0
        %v432 = vsel %vm402, %v382, 0.0
        %v433 = vadd.f32 %v431, %v432
        %v434 = vsel %vm402, %v390, 0.0
        %v435 = vadd.f32 %v433, %v434
        %v436 = vsel %vm402, %v398, 0.0
        %v437 = vadd.f32 %v435, %v436
        %v438 = vsel %vm402, %v375, 0.0
        %v439 = vsel %vm402, %v383, 0.0
        %v440 = vadd.f32 %v438, %v439
        %v441 = vsel %vm402, %v391, 0.0
        %v442 = vadd.f32 %v440, %v441
        %v443 = vsel %vm402, %v399, 0.0
        %v444 = vadd.f32 %v442, %v443
        %v445 = vsel %vm402, %v376, 0.0
        %v446 = vsel %vm402, %v384, 0.0
        %v447 = vadd.f32 %v445, %v446
        %v448 = vsel %vm402, %v392, 0.0
        %v449 = vadd.f32 %v447, %v448
        %v450 = vsel %vm402, %v400, 0.0
        %v451 = vadd.f32 %v449, %v450
        %v452 = vsel %vm402, %v377, 0.0
        %v453 = vsel %vm402, %v385, 0.0
        %v454 = vadd.f32 %v452, %v453
        %v455 = vsel %vm402, %v393, 0.0
        %v456 = vadd.f32 %v454, %v455
        %v457 = vsel %vm402, %v401, 0.0
        %v458 = vadd.f32 %v456, %v457
        %v459 = vpack.c.bf16 %v416, %v409
        %v460 = vpack.c.bf16 %v430, %v423
        %v461 = vpack.c.bf16 %v444, %v437
        %v462 = vpack.c.bf16 %v458, %v451
        %v463 = vld [vmem:[%s3] sm:$0x3]
        %v465 = vsel %vm402, %v459, 0
        %v468 = vsel %vm402, %v460, 0
        %v471 = vsel %vm402, %v461, 0
        %v474 = vsel %vm402, %v462, 0
        %vm476 = vcmask 1041408
        %v478 = vsel %vm476, %v463, 0
        %480 = vmatprep.subr.bf16.mxu0 0
        %481 = vmatpush1.bf16.msra.mxu0 %v478
        %482 = vmatprep.subr.bf16.mxu0 0
        %483 = vmatpush1.bf16.msra.mxu0 0
        %484 = vmatprep.subr.bf16.mxu0 0
        %485 = vmatpush1.bf16.msra.mxu0 0
        %486 = vmatprep.subr.bf16.mxu0 0
        %487 = vmatpush1.bf16.msra.mxu0 0
        %488 = vmatprep.subr.bf16.mxu0 0
        %489 = vmatpush1.bf16.msra.mxu0 0
        %490 = vmatprep.subr.bf16.mxu0 0
        %491 = vmatpush1.bf16.msra.mxu0 0
        %492 = vmatprep.subr.bf16.mxu0 0
        %493 = vmatpush1.bf16.msra.mxu0 0
        %494 = vmatprep.subr.bf16.mxu0 0
        %495 = vmatpush1.bf16.msra.mxu0 0
        %496 = vmatprep.subr.bf16.mxu0 0
        %497 = vmatpush1.bf16.msra.mxu0 0
        %498 = vmatprep.subr.bf16.mxu0 0
        %499 = vmatpush1.bf16.msra.mxu0 0
        %500 = vmatprep.subr.bf16.mxu0 0
        %501 = vmatpush1.bf16.msra.mxu0 0
        %502 = vmatprep.subr.bf16.mxu0 0
        %503 = vmatpush1.bf16.msra.mxu0 0
        %504 = vmatprep.subr.bf16.mxu0 0
        %505 = vmatpush1.bf16.msra.mxu0 0
        %506 = vmatprep.subr.bf16.mxu0 0
        %507 = vmatpush1.bf16.msra.mxu0 0
        %508 = vmatprep.subr.bf16.mxu0 0
        %509 = vmatpush1.bf16.msra.mxu0 0
        %510 = vmatprep.subr.bf16.mxu0 0
        %511 = vmatpush1.bf16.msra.mxu0 0
        %512 = vmatprep.mubr.bf16.mxu0 0
        %513 = vmatmul.mubr.bf16.gmra.mrb[0].mxu0 %v465
        %v514 = vpop.f32.mrb[0].mxu0
        %v515 = vadd.f32 0.0, %v514
        %v516 = vpop.f32.mrb[0].mxu0
        %v517 = vpop.f32.mrb[0].mxu0
        %v518 = vadd.f32 0.0, %v517
        %v519 = vpop.f32.mrb[0].mxu0
        %520 = vmatprep.mubr.bf16.mxu0 0
        %521 = vmatmul.mubr.bf16.gmra.mrb[0].mxu0 %v468
        %v522 = vpop.f32.mrb[0].mxu0
        %v523 = vadd.f32 0.0, %v522
        %v524 = vpop.f32.mrb[0].mxu0
        %v525 = vpop.f32.mrb[0].mxu0
        %v526 = vadd.f32 0.0, %v525
        %v527 = vpop.f32.mrb[0].mxu0
        %528 = vmatprep.mubr.bf16.mxu0 0
        %529 = vmatmul.mubr.bf16.gmra.mrb[0].mxu0 %v471
        %v530 = vpop.f32.mrb[0].mxu0
        %v531 = vadd.f32 0.0, %v530
        %v532 = vpop.f32.mrb[0].mxu0
        %v533 = vpop.f32.mrb[0].mxu0
        %v534 = vadd.f32 0.0, %v533
        %v535 = vpop.f32.mrb[0].mxu0
        %536 = vmatprep.mubr.bf16.mxu0 0
        %537 = vmatmul.mubr.bf16.gmra.mrb[0].mxu0 %v474
        %v538 = vpop.f32.mrb[0].mxu0
        %v539 = vadd.f32 0.0, %v538
        %v540 = vpop.f32.mrb[0].mxu0
        %v541 = vpop.f32.mrb[0].mxu0
        %v542 = vadd.f32 0.0, %v541
        %v543 = vpop.f32.mrb[0].mxu0
        %544 = vdwg.mxu0
        %545 = vst [vmem:[%s215] sm:$0xff] %v515
        %546 = vst [vmem:[%s215 + $0x8] sm:$0xff] %v518
        %547 = vst [vmem:[%s215 + $0x10] sm:$0xff] %v523
        %548 = vst [vmem:[%s215 + $0x18] sm:$0xff] %v526
        %549 = vst [vmem:[%s215 + $0x20] sm:$0xff] %v531
        %550 = vst [vmem:[%s215 + $0x28] sm:$0xff] %v534
        %551 = vst [vmem:[%s215 + $0x30] sm:$0xff] %v539
        %552 = vst [vmem:[%s215 + $0x38] sm:$0xff] %v542
        %s553 = sand.u32 %s131, 1
        %s554 = scalar_lea.sflag [#allocation3], %s553
        %s555 = sand.u32 %s131, 1
        %s556 = smul.addr %s555, 64
        %s557 = scalar_lea.vmem [#allocation2], %s556
        // Predicated region
        $region37: #{tpu_custom_call.1} parent=35 // pred_check
          %p558 = pneg %p141
        $region38: #{tpu_custom_call.1} parent=35 // pred_check_branch
          %560 = sbr.rel (%p558) target = $region40
        $region39: #{tpu_custom_call.1} parent=35 // pred_region
          %s561 = smul.u32 8, %s23
          %s563 = ssub.s32 1024, 1024
          %564 = vsyncadd %s554, %s563
          %s565 = smul.addr %s22, 8
          %s566 = sadd.s32 %s561, %s565
          %s567 = smul.addr %s566, 128
          %s568 = scalar_lea.hbm %s4, %s567
          %s569 = sshll.u32 %s557, 4
          %s570 = int_to_ptr.vmem [resolvable:$true] %s569
          %575 = dma.vmem_to_hbm [thread:$0]  %s570, 1024, %s568, %s554, 128, 128, 8
        $region40: #{tpu_custom_call.1} parent=35 // pred_fallthru
          _
      $region36: #{tpu_custom_call.1} parent=5 // pred_fallthru
        _
      %p576 = scmp.le.s32.totalorder 2, %s13
      // Predicated region
      $region41: #{tpu_custom_call.1} parent=5 // pred_check
        %p577 = pneg %p576
      $region42: #{tpu_custom_call.1} parent=5 // pred_check_branch
        %579 = sbr.rel (%p577) target = $region44
      $region43: #{tpu_custom_call.1} parent=5 // pred_region
        %s580 = ssub.s32 %s13, 2
        // Predicated region
        $region45: #{tpu_custom_call.1} parent=43 // pred_check
          %p581 = pneg %p147
        $region46: #{tpu_custom_call.1} parent=43 // pred_check_branch
          %583 = sbr.rel (%p581) target = $region48
        $region47: #{tpu_custom_call.1} parent=43 // pred_region
          %s584 = sand.u32 %s132, 1
          %s585 = scalar_lea.sflag [#allocation3], %s584
          %s586 = sand.u32 %s132, 1
          %s587 = smul.addr %s586, 64
          %s588 = scalar_lea.vmem [#allocation2], %s587
          %589 = dma.done %s585, 1024
        $region48: #{tpu_custom_call.1} parent=43 // pred_fallthru
          _
      $region44: #{tpu_custom_call.1} parent=5 // pred_fallthru
        _
    $region6: #{tpu_custom_call.1} parent=1 // loop_footer
      %s17 = sadd.s32 1, %s13
    $region7: #{tpu_custom_call.1} parent=1 // loop_footer_branch
      %12 = sbr.rel target = $region3
    $region8: #{tpu_custom_call.1} parent=1 // loop_exit
      _
    %590 = vsyncpa [#allocation3], 1
    %s591 = scalar_lea.sflag [#allocation3], 1
    %592 = vsyncpa %s591, 1

</llo_original>
